<compile_context>
chip_gen: v6e
topology: v6e:2x2x1
jax: 0.10.0
libtpu: 0.0.40
codegen_flags: <defaults>
</compile_context>

<pallas_src>
import functools

import jax
import jax.numpy as jnp
from jax.experimental import pallas as pl
from jax.experimental.pallas import tpu as pltpu


MXU_DTYPE = jnp.bfloat16  # matmul-operand dtype (f32 accumulation on the MXU everywhere)


def _round_up(n, m):
    return ((n + m - 1) // m) * m


def _act_dtype_for_device():
    """bf16 inter-layer activations on chips with a packed-bf16 VPU (v6e/v7x); f32 otherwise."""
    try:
        kind = jax.devices()[0].device_kind.lower()
    except Exception:
        return jnp.float32
    if any(tag in kind for tag in ("v6", "v7", "tpu7", "trillium")):
        return jnp.bfloat16
    return jnp.float32


def _make_mlp_kernel(in_dim, n_layers, last_is_reduction, act_dtype, tile, sub):
    """Build the fused-MLP kernel body for a static layer/tile configuration."""
    n_sub = tile // sub

    def kernel(x_ref, *refs):
        *wb, out_ref = refs

        def run_layers(h):
            # h: (sub, in_dim) float32
            w0, b0 = wb[0], wb[1]
            if in_dim == 1:
                # Degenerate K=1 first layer: outer product on the VPU (no MXU round trip).
                y = h * w0[...] + b0[...]
            else:
                y = jnp.dot(h.astype(MXU_DTYPE), w0[...],
                            preferred_element_type=jnp.float32) + b0[...]
            h = jnp.maximum(y, 0.0).astype(act_dtype)

            # Hidden layers: bf16 operands / f32 accumulation on the MXU,
            # bias-add + ReLU in act_dtype (bf16 on v6e/v7x, f32 on v5e).
            for li in range(1, n_layers - 1):
                w_ref, b_ref = wb[2 * li], wb[2 * li + 1]
                y = jnp.dot(h.astype(MXU_DTYPE), w_ref[...],
                            preferred_element_type=jnp.float32)
                h = jnp.maximum(y.astype(act_dtype) + b_ref[...], 0.0)

            # Final layer.
            w_l, b_l = wb[-2], wb[-1]
            if last_is_reduction:
                # label_dim == 1: lane reduction (VPU mul + XLU sum) instead of an MXU matmul
                # whose weight would have 127 dead columns; output stays 1 lane wide.
                out = jnp.sum(h.astype(jnp.float32) * w_l[...], axis=-1,
                              keepdims=True) + b_l[...]
            else:
                out = jnp.dot(h.astype(MXU_DTYPE), w_l[...],
                              preferred_element_type=jnp.float32) + b_l[...]
            return out.astype(out_ref.dtype)

        if n_sub == 1:
            out_ref[...] = run_layers(x_ref[...].astype(jnp.float32))
        else:
            # Sub-block the big batch tile so each sub-slice's live set stays well under the
            # 64-vreg file (avoids spills eating the vld/vst slots — critical on v5e's single
            # vst slot), while the outer tile amortizes per-grid-step pipeline overhead.
            def body(s, carry):
                off = pl.multiple_of(s * sub, sub)
                h = x_ref[pl.ds(off, sub), :].astype(jnp.float32)
                out_ref[pl.ds(off, sub), :] = run_layers(h)
                return carry

            jax.lax.fori_loop(0, n_sub, body, 0, unroll=True)

    return kernel


@functools.partial(jax.jit, static_argnames=("batch_tile", "sub_rows", "act_dtype"))
def mlp_forward(x, params, batch_tile=2048, sub_rows=None, act_dtype=None):
    if act_dtype is None:
        act_dtype = _act_dtype_for_device()
    if sub_rows is None:
        # 256-row sub-blocks on bf16-VPU chips (v6e/v7x); 128 on f32-VPU chips (v5e and older).
        sub_rows = 256 if act_dtype == jnp.bfloat16 else 128

    B, in_dim = x.shape
    n_layers = len(params)
    assert n_layers >= 2, "kernel assumes at least two Linear layers"
    label_dim = params[-1][0].shape[1]
    last_is_reduction = (label_dim == 1)

    # ---- batch tiling: big tile (amortizes per-grid-step overhead), >=2 steps when possible
    # ---- so both v7x TensorCores get work; ragged last block handled by Pallas edge masking.
    tile = max(8, (min(batch_tile, _round_up(B, 8)) // 8) * 8)
    if pl.cdiv(B, tile) < 2 and B > 8:
        tile = _round_up(pl.cdiv(B, 2), 8)
    sub = max(8, (min(sub_rows, tile) // 8) * 8)
    if tile % sub:
        tile = _round_up(tile, sub)
    n_steps = pl.cdiv(B, tile)

    # ---- weights/biases stay at their native widths (no padding); intermediate activations
    # ---- never touch HBM and full-array weight blocks satisfy the BlockSpec rules.
    flat_inputs = [x.astype(jnp.float32)]
    in_specs = [pl.BlockSpec((tile, in_dim), lambda i: (i, 0))]
    for li, (w, b) in enumerate(params):
        b2 = b.reshape(1, -1)
        if li == 0 and in_dim == 1:
            w_k, b_k = w.astype(jnp.float32), b2.astype(jnp.float32)          # VPU path
        elif li == 0:
            w_k, b_k = w.astype(MXU_DTYPE), b2.astype(jnp.float32)
        elif li == n_layers - 1 and last_is_reduction:
            # Final (fan_in, 1) weight stored as a (1, fan_in) f32 row for the lane reduction.
            w_k, b_k = w.reshape(1, -1).astype(jnp.float32), b2.astype(jnp.float32)
        elif li == n_layers - 1:
            w_k, b_k = w.astype(MXU_DTYPE), b2.astype(jnp.float32)
        else:
            w_k, b_k = w.astype(MXU_DTYPE), b2.astype(act_dtype)
        flat_inputs += [w_k, b_k]
        # Constant block index => the pipeliner keeps these resident, no re-DMA per step.
        in_specs += [pl.BlockSpec(w_k.shape, lambda i: (0, 0)),
                     pl.BlockSpec(b_k.shape, lambda i: (0, 0))]

    total_mac = sum(int(w.shape[0]) * int(w.shape[1]) for w, _ in params)
    cost = pl.CostEstimate(
        flops=2 * B * total_mac,
        transcendentals=0,
        bytes_accessed=int(x.size) * 4 + B * label_dim * 4
        + sum(int(w.size) * 2 + int(b.size) * 4 for w, b in params),
    )

    kernel = _make_mlp_kernel(in_dim, n_layers, last_is_reduction, act_dtype, tile, sub)

    return pl.pallas_call(
        kernel,
        out_shape=jax.ShapeDtypeStruct((B, label_dim), jnp.float32),
        grid_spec=pltpu.PrefetchScalarGridSpec(
            num_scalar_prefetch=0,
            grid=(n_steps,),
            in_specs=in_specs,
            out_specs=pl.BlockSpec((tile, label_dim), lambda i: (i, 0)),
        ),
        compiler_params=pltpu.CompilerParams(
            dimension_semantics=("parallel",)),
        cost_estimate=cost,
    )(*flat_inputs)


def init_linear(key, fan_in, fan_out):
    """Deterministic init mimicking PyTorch nn.Linear default (uniform +-1/sqrt(fan_in)).

    Weight is returned transposed as (fan_in, fan_out) so the kernel computes x @ W.
    Bias is returned as (1, fan_out) to keep it 2-D for the TPU vector unit.
    """
    kw, kb = jax.random.split(key)
    bound = 1.0 / jnp.sqrt(jnp.float32(fan_in))
    w = jax.random.uniform(kw, (fan_in, fan_out), jnp.float32, -bound, bound)
    b = jax.random.uniform(kb, (1, fan_out), jnp.float32, -bound, bound)
    return w, b


def make_params(key, in_dim=1, label_dim=1, feature_dim=128,
                feature_extractor_dims=(128,), label_classifier_dims=(64, 64)):
    dims = ([in_dim] + list(feature_extractor_dims) + [feature_dim]
            + list(label_classifier_dims) + [label_dim])
    keys = jax.random.split(key, len(dims) - 1)
    return [init_linear(k, dims[i], dims[i + 1]) for i, k in enumerate(keys)]


def mlp_reference(x, params, act_dtype=None, mxu_dtype=MXU_DTYPE):
    """Plain-JAX reference mirroring the kernel's numerics.

    With act_dtype=mxu_dtype=float32 it is instead a faithful f32 MLP forward
    (the original PyTorch-module semantics, up to matmul precision).
    """
    if act_dtype is None:
        act_dtype = _act_dtype_for_device()
    prec = jax.lax.Precision.HIGHEST if mxu_dtype == jnp.float32 else None
    n = len(params)
    h = x.astype(jnp.float32)
    for li, (w, b) in enumerate(params):
        b2 = b.reshape(1, -1)
        last = (li == n - 1)
        if li == 0 and w.shape[0] == 1:
            y = h * w.astype(jnp.float32) + b2.astype(jnp.float32)
        elif last and w.shape[1] == 1:
            y = jnp.sum(h.astype(jnp.float32) * w.reshape(1, -1).astype(jnp.float32),
                        axis=-1, keepdims=True) + b2.astype(jnp.float32)
        else:
            y = jnp.dot(h.astype(mxu_dtype), w.astype(mxu_dtype),
                        preferred_element_type=jnp.float32, precision=prec)
            if li == 0 or last:
                y = y + b2.astype(jnp.float32)
            else:
                y = y.astype(act_dtype) + b2.astype(act_dtype)
        if last:
            h = y.astype(jnp.float32)
        else:
            h = jnp.maximum(y, 0.0)
            if li == 0:
                h = h.astype(act_dtype)
    return h


if __name__ == "__main__":
    key = jax.random.PRNGKey(0)
    k_params, k_x = jax.random.split(key)

    in_dim, label_dim = 1, 1
    B = 20  # deliberately not a multiple of the batch tile: exercises the ragged-last-block path

    params = make_params(k_params, in_dim=in_dim, label_dim=label_dim)
    x = jax.random.normal(k_x, (B, in_dim), jnp.float32)

    act_dtype = _act_dtype_for_device()

    out = jax.block_until_ready(mlp_forward(x, params, act_dtype=act_dtype))
    assert out.shape == (B, label_dim), out.shape

    # Reference replicating the kernel's numerics (bf16 MXU operands, f32 accumulation).
    ref = mlp_reference(x, params, act_dtype=act_dtype)
    assert jnp.allclose(out, ref, atol=2e-3, rtol=2e-3), (out, ref)

    # Loose check against a full-f32 forward (documents the bf16-operand contract).
    ref_f32 = mlp_reference(x, params, act_dtype=jnp.float32, mxu_dtype=jnp.float32)
    assert jnp.allclose(out, ref_f32, atol=5e-2, rtol=5e-2), (out, ref_f32)

    print("KERNEL_OK")
</pallas_src>

<mosaic_0001>
module attributes {stable_mosaic.version = 11 : i64} {
  func.func @kernel(%arg0: i32, %arg1: memref<16x1xf32, #tpu.memory_space<vmem>>, %arg2: memref<1x128xf32, #tpu.memory_space<vmem>>, %arg3: memref<1x128xf32, #tpu.memory_space<vmem>>, %arg4: memref<128x128xbf16, #tpu.memory_space<vmem>>, %arg5: memref<1x128xf32, #tpu.memory_space<vmem>>, %arg6: memref<128x64xbf16, #tpu.memory_space<vmem>>, %arg7: memref<1x64xf32, #tpu.memory_space<vmem>>, %arg8: memref<64x64xbf16, #tpu.memory_space<vmem>>, %arg9: memref<1x64xf32, #tpu.memory_space<vmem>>, %arg10: memref<1x64xf32, #tpu.memory_space<vmem>>, %arg11: memref<1x1xf32, #tpu.memory_space<vmem>>, %arg12: memref<16x1xf32, #tpu.memory_space<vmem>>) attributes {dimension_semantics = [#tpu.dimension_semantics<parallel>], iteration_bounds = array<i64: 2>, scalar_prefetch = 0 : i64, scratch_operands = 0 : i64, tpu.core_type = #tpu.core_type<tc>, window_params = [{transform_indices = @transform_0, window_bounds = array<i64: 16, 1>}, {pipeline_mode = #tpu.pipeline_mode<synchronous>, transform_indices = @transform_1, window_bounds = array<i64: 1, 128>}, {pipeline_mode = #tpu.pipeline_mode<synchronous>, transform_indices = @transform_2, window_bounds = array<i64: 1, 128>}, {pipeline_mode = #tpu.pipeline_mode<synchronous>, transform_indices = @transform_3, window_bounds = array<i64: 128, 128>}, {pipeline_mode = #tpu.pipeline_mode<synchronous>, transform_indices = @transform_4, window_bounds = array<i64: 1, 128>}, {pipeline_mode = #tpu.pipeline_mode<synchronous>, transform_indices = @transform_5, window_bounds = array<i64: 128, 64>}, {pipeline_mode = #tpu.pipeline_mode<synchronous>, transform_indices = @transform_6, window_bounds = array<i64: 1, 64>}, {pipeline_mode = #tpu.pipeline_mode<synchronous>, transform_indices = @transform_7, window_bounds = array<i64: 64, 64>}, {pipeline_mode = #tpu.pipeline_mode<synchronous>, transform_indices = @transform_8, window_bounds = array<i64: 1, 64>}, {pipeline_mode = #tpu.pipeline_mode<synchronous>, transform_indices = @transform_9, window_bounds = array<i64: 1, 64>}, {pipeline_mode = #tpu.pipeline_mode<synchronous>, transform_indices = @transform_10, window_bounds = array<i64: 1, 1>}, {transform_indices = @transform_11, window_bounds = array<i64: 16, 1>}]} {
    %c0 = arith.constant 0 : index
    %c0_0 = arith.constant 0 : index
    %0 = vector.load %arg1[%c0, %c0_0] : memref<16x1xf32, #tpu.memory_space<vmem>>, vector<16x1xf32>
    %c0_1 = arith.constant 0 : index
    %c0_2 = arith.constant 0 : index
    %1 = vector.load %arg2[%c0_1, %c0_2] : memref<1x128xf32, #tpu.memory_space<vmem>>, vector<1x128xf32>
    %2 = vector.broadcast %0 : vector<16x1xf32> to vector<16x128xf32>
    %3 = vector.broadcast %1 : vector<1x128xf32> to vector<16x128xf32>
    %4 = arith.mulf %2, %3 : vector<16x128xf32>
    %c0_3 = arith.constant 0 : index
    %c0_4 = arith.constant 0 : index
    %5 = vector.load %arg3[%c0_3, %c0_4] : memref<1x128xf32, #tpu.memory_space<vmem>>, vector<1x128xf32>
    %6 = vector.broadcast %5 : vector<1x128xf32> to vector<16x128xf32>
    %7 = arith.addf %4, %6 : vector<16x128xf32>
    %cst = arith.constant 0.000000e+00 : f32
    %8 = vector.broadcast %cst : f32 to vector<16x128xf32>
    %9 = arith.maximumf %7, %8 : vector<16x128xf32>
    %10 = arith.truncf %9 : vector<16x128xf32> to vector<16x128xbf16>
    %c0_5 = arith.constant 0 : index
    %c0_6 = arith.constant 0 : index
    %11 = vector.load %arg4[%c0_5, %c0_6] : memref<128x128xbf16, #tpu.memory_space<vmem>>, vector<128x128xbf16>
    %cst_7 = arith.constant dense<0.000000e+00> : vector<16x128xf32>
    %12 = tpu.matmul %10, %11, %cst_7 {dimension_numbers = #tpu.dot_dimension_numbers<[1], [0], [0], [1], [0, 0, 1, 1], [], []>} : vector<16x128xbf16>, vector<128x128xbf16>, vector<16x128xf32> -> vector<16x128xf32>
    %c0_8 = arith.constant 0 : index
    %c0_9 = arith.constant 0 : index
    %13 = vector.load %arg5[%c0_8, %c0_9] : memref<1x128xf32, #tpu.memory_space<vmem>>, vector<1x128xf32>
    %14 = vector.broadcast %13 : vector<1x128xf32> to vector<16x128xf32>
    %15 = arith.addf %12, %14 : vector<16x128xf32>
    %cst_10 = arith.constant 0.000000e+00 : f32
    %16 = vector.broadcast %cst_10 : f32 to vector<16x128xf32>
    %17 = arith.maximumf %15, %16 : vector<16x128xf32>
    %18 = arith.truncf %17 : vector<16x128xf32> to vector<16x128xbf16>
    %c0_11 = arith.constant 0 : index
    %c0_12 = arith.constant 0 : index
    %19 = vector.load %arg6[%c0_11, %c0_12] : memref<128x64xbf16, #tpu.memory_space<vmem>>, vector<128x64xbf16>
    %cst_13 = arith.constant dense<0.000000e+00> : vector<16x64xf32>
    %20 = tpu.matmul %18, %19, %cst_13 {dimension_numbers = #tpu.dot_dimension_numbers<[1], [0], [0], [1], [0, 0, 1, 1], [], []>} : vector<16x128xbf16>, vector<128x64xbf16>, vector<16x64xf32> -> vector<16x64xf32>
    %c0_14 = arith.constant 0 : index
    %c0_15 = arith.constant 0 : index
    %21 = vector.load %arg7[%c0_14, %c0_15] : memref<1x64xf32, #tpu.memory_space<vmem>>, vector<1x64xf32>
    %22 = vector.broadcast %21 : vector<1x64xf32> to vector<16x64xf32>
    %23 = arith.addf %20, %22 : vector<16x64xf32>
    %cst_16 = arith.constant 0.000000e+00 : f32
    %24 = vector.broadcast %cst_16 : f32 to vector<16x64xf32>
    %25 = arith.maximumf %23, %24 : vector<16x64xf32>
    %26 = arith.truncf %25 : vector<16x64xf32> to vector<16x64xbf16>
    %c0_17 = arith.constant 0 : index
    %c0_18 = arith.constant 0 : index
    %27 = vector.load %arg8[%c0_17, %c0_18] : memref<64x64xbf16, #tpu.memory_space<vmem>>, vector<64x64xbf16>
    %cst_19 = arith.constant dense<0.000000e+00> : vector<16x64xf32>
    %28 = tpu.matmul %26, %27, %cst_19 {dimension_numbers = #tpu.dot_dimension_numbers<[1], [0], [0], [1], [0, 0, 1, 1], [], []>} : vector<16x64xbf16>, vector<64x64xbf16>, vector<16x64xf32> -> vector<16x64xf32>
    %c0_20 = arith.constant 0 : index
    %c0_21 = arith.constant 0 : index
    %29 = vector.load %arg9[%c0_20, %c0_21] : memref<1x64xf32, #tpu.memory_space<vmem>>, vector<1x64xf32>
    %30 = vector.broadcast %29 : vector<1x64xf32> to vector<16x64xf32>
    %31 = arith.addf %28, %30 : vector<16x64xf32>
    %cst_22 = arith.constant 0.000000e+00 : f32
    %32 = vector.broadcast %cst_22 : f32 to vector<16x64xf32>
    %33 = arith.maximumf %31, %32 : vector<16x64xf32>
    %c0_23 = arith.constant 0 : index
    %c0_24 = arith.constant 0 : index
    %34 = vector.load %arg10[%c0_23, %c0_24] : memref<1x64xf32, #tpu.memory_space<vmem>>, vector<1x64xf32>
    %35 = vector.broadcast %34 : vector<1x64xf32> to vector<16x64xf32>
    %36 = arith.mulf %33, %35 : vector<16x64xf32>
    %cst_25 = arith.constant dense<0.000000e+00> : vector<16xf32>
    %37 = vector.multi_reduction <add>, %36, %cst_25 [1] : vector<16x64xf32> to vector<16xf32>
    %38 = vector.shape_cast %37 : vector<16xf32> to vector<16x1xf32>
    %c0_26 = arith.constant 0 : index
    %c0_27 = arith.constant 0 : index
    %39 = vector.load %arg11[%c0_26, %c0_27] : memref<1x1xf32, #tpu.memory_space<vmem>>, vector<1x1xf32>
    %40 = vector.broadcast %39 : vector<1x1xf32> to vector<16x1xf32>
    %41 = arith.addf %38, %40 : vector<16x1xf32>
    %c0_28 = arith.constant 0 : index
    %c0_29 = arith.constant 0 : index
    %42 = vector.load %arg12[%c0_28, %c0_29] : memref<16x1xf32, #tpu.memory_space<vmem>>, vector<16x1xf32>
    tpu.vector_store %arg12[%c0_28, %c0_29], %41 {strides = array<i32>} : memref<16x1xf32, #tpu.memory_space<vmem>>, vector<16x1xf32>,
    return
  }
  func.func @transform_0(%arg0: i32) -> (i32, i32) {
    %c0_i32 = arith.constant 0 : i32
    %c0_i32_0 = arith.constant 0 : i32
    return %arg0, %c0_i32 : i32, i32
  }
  func.func @transform_1(%arg0: i32) -> (i32, i32) {
    %c0_i32 = arith.constant 0 : i32
    %c0_i32_0 = arith.constant 0 : i32
    %c0_i32_1 = arith.constant 0 : i32
    return %c0_i32, %c0_i32_0 : i32, i32
  }
  func.func @transform_2(%arg0: i32) -> (i32, i32) {
    %c0_i32 = arith.constant 0 : i32
    %c0_i32_0 = arith.constant 0 : i32
    %c0_i32_1 = arith.constant 0 : i32
    return %c0_i32, %c0_i32_0 : i32, i32
  }
  func.func @transform_3(%arg0: i32) -> (i32, i32) {
    %c0_i32 = arith.constant 0 : i32
    %c0_i32_0 = arith.constant 0 : i32
    %c0_i32_1 = arith.constant 0 : i32
    return %c0_i32, %c0_i32_0 : i32, i32
  }
  func.func @transform_4(%arg0: i32) -> (i32, i32) {
    %c0_i32 = arith.constant 0 : i32
    %c0_i32_0 = arith.constant 0 : i32
    %c0_i32_1 = arith.constant 0 : i32
    return %c0_i32, %c0_i32_0 : i32, i32
  }
  func.func @transform_5(%arg0: i32) -> (i32, i32) {
    %c0_i32 = arith.constant 0 : i32
    %c0_i32_0 = arith.constant 0 : i32
    %c0_i32_1 = arith.constant 0 : i32
    return %c0_i32, %c0_i32_0 : i32, i32
  }
  func.func @transform_6(%arg0: i32) -> (i32, i32) {
    %c0_i32 = arith.constant 0 : i32
    %c0_i32_0 = arith.constant 0 : i32
    %c0_i32_1 = arith.constant 0 : i32
    return %c0_i32, %c0_i32_0 : i32, i32
  }
  func.func @transform_7(%arg0: i32) -> (i32, i32) {
    %c0_i32 = arith.constant 0 : i32
    %c0_i32_0 = arith.constant 0 : i32
    %c0_i32_1 = arith.constant 0 : i32
    return %c0_i32, %c0_i32_0 : i32, i32
  }
  func.func @transform_8(%arg0: i32) -> (i32, i32) {
    %c0_i32 = arith.constant 0 : i32
    %c0_i32_0 = arith.constant 0 : i32
    %c0_i32_1 = arith.constant 0 : i32
    return %c0_i32, %c0_i32_0 : i32, i32
  }
  func.func @transform_9(%arg0: i32) -> (i32, i32) {
    %c0_i32 = arith.constant 0 : i32
    %c0_i32_0 = arith.constant 0 : i32
    %c0_i32_1 = arith.constant 0 : i32
    return %c0_i32, %c0_i32_0 : i32, i32
  }
  func.func @transform_10(%arg0: i32) -> (i32, i32) {
    %c0_i32 = arith.constant 0 : i32
    %c0_i32_0 = arith.constant 0 : i32
    %c0_i32_1 = arith.constant 0 : i32
    return %c0_i32, %c0_i32_0 : i32, i32
  }
  func.func @transform_11(%arg0: i32) -> (i32, i32) {
    %c0_i32 = arith.constant 0 : i32
    %c0_i32_0 = arith.constant 0 : i32
    return %arg0, %c0_i32 : i32, i32
  }
}

</mosaic_0001>

<llo_original>
// kernel: mlp_forward.1
$region0: #{mlp_forward.1}
  #allocation0 [shape = 'u32[]', space=smem, size = 0x4, offset = 0x4, fixed_abs, tag = 'smem constant byte address 0x4 - core index']
  #allocation1 [shape = 'u32[144,128]{1,0:T(1,128)}', space=vmem, size = 0x12000, scoped, tag = 'internal scratch']
  #allocation2 [shape = 'f32[1,1]{1,0:T(1,128)S(1)}', space=vmem, size = 0x200, scoped, tag = 'scoped memory for mlp_forward.1']
  %s0 = inlined_call_operand.vmem [shape: f32[20,1], index: 0, kind: input, shape index: {}]
  %s1 = inlined_call_operand.vmem [shape: f32[1,128], index: 1, kind: input, shape index: {}]
  %s2 = inlined_call_operand.vmem [shape: f32[1,128], index: 2, kind: input, shape index: {}]
  %s3 = inlined_call_operand.vmem [shape: bf16[128,128], index: 3, kind: input, shape index: {}]
  %s4 = inlined_call_operand.vmem [shape: f32[1,128], index: 4, kind: input, shape index: {}]
  %s5 = inlined_call_operand.vmem [shape: bf16[128,64], index: 5, kind: input, shape index: {}]
  %s6 = inlined_call_operand.vmem [shape: f32[1,64], index: 6, kind: input, shape index: {}]
  %s7 = inlined_call_operand.vmem [shape: bf16[64,64], index: 7, kind: input, shape index: {}]
  %s8 = inlined_call_operand.vmem [shape: f32[1,64], index: 8, kind: input, shape index: {}]
  %s9 = inlined_call_operand.vmem [shape: f32[1,64], index: 9, kind: input, shape index: {}]
  %s10 = inlined_call_operand.<no memory space> [shape: f32[1,1], index: 10, kind: input, shape index: {}]
  %s11 = inlined_call_operand.vmem [shape: f32[20,1], index: 11, kind: output, shape index: {}]
  %s12 = sld [smem:[#allocation0]]
  $region125: #{mlp_forward.1} parent=0
    _
  %s14 = ssub.s32 1, %s12
  %s15 = scalar_select 0, %s14, %s12
  %v16 = vstv %s10
  %17 = vst [vmem:[#allocation2] sm:$0x1] %v16
  $region1: #{mlp_forward.1} parent=0
    #allocation3 [shape = 'u8[16384]{0}', space=vmem, size = 0x4000, scoped, tag = 'output window, operand 0']
    loop: start=0, step=1, limit=4
    $region2: #{mlp_forward.1} parent=1 // loop_pre_header
      _
    $region3: #{mlp_forward.1} parent=1 // loop_header
      %s19 = sphi 0, %s23
      %p20 = scmp.ge.s32.totalorder %s19, 4
      %s29 = sphi 0, %s31
      %s32 = sphi 0, %s29
      %s33 = sphi 0, %s32
      %s49 = sphi 0, %s33
      %s53 = sphi 0, %s53
      %s55 = sphi 0, %s53
      %s56 = sphi 0, %s55
      %s70 = sphi 0, %s56
      %s74 = sphi 0, %s74
      %s76 = sphi 0, %s74
      %s77 = sphi 0, %s76
      %s91 = sphi 0, %s77
      %s95 = sphi 0, %s95
      %s97 = sphi 0, %s95
      %s98 = sphi 0, %s97
      %s112 = sphi 0, %s98
      %s116 = sphi 0, %s116
      %s118 = sphi 0, %s116
      %s119 = sphi 0, %s118
      %s133 = sphi 0, %s119
      %s137 = sphi 0, %s137
      %s139 = sphi 0, %s137
      %s140 = sphi 0, %s139
      %s154 = sphi 0, %s140
      %s158 = sphi 0, %s158
      %s160 = sphi 0, %s158
      %s161 = sphi 0, %s160
      %s175 = sphi 0, %s161
      %s179 = sphi 0, %s179
      %s181 = sphi 0, %s179
      %s182 = sphi 0, %s181
      %s196 = sphi 0, %s182
      %s200 = sphi 0, %s200
      %s202 = sphi 0, %s200
      %s203 = sphi 0, %s202
      %s217 = sphi 0, %s203
      %s221 = sphi 0, %s221
      %s223 = sphi 0, %s221
      %s224 = sphi 0, %s223
      %s238 = sphi 0, %s224
      %s242 = sphi 0, %s242
      %s244 = sphi 0, %s242
      %s245 = sphi 0, %s244
      %s259 = sphi 0, %s245
      %s265 = sphi 0, %s267
      %s268 = sphi 0, %s265
      %s269 = sphi 0, %s268
      %s285 = sphi 0, %s269
    $region4: #{mlp_forward.1} parent=1 // loop_header_branch
      %22 = sbr.rel (%p20) target = $region8
    $region5: #{mlp_forward.1} parent=1 // loop_body
      %s24 = ssub.s32 %s19, 1
      %s25 = ssub.s32 %s19, 2
      %s26 = sadd.s32 %s19, 1
      %s27 = ssub.s32 %s19, %s26
      %p28 = scmp.eq.s32.totalorder %s27, 0
      %s30 = sadd.s32 %s29, 1
      %s31 = scalar_select %p28, %s29, %s30
      %p34 = pneg %p28
      %p35 = scmp.eq.s32.totalorder %s19, 1
      %p36 = por %p34, %p35
      %p37 = scmp.ne.s32.totalorder %s29, %s32
      %p38 = scmp.eq.s32.totalorder %s19, 0
      %p39 = por %p37, %p38
      %p40 = scmp.ne.s32.totalorder %s29, %s32
      %p41 = scmp.eq.s32.totalorder %s24, 1
      %p42 = por %p40, %p41
      %p43 = scmp.ne.s32.totalorder %s32, %s33
      %p44 = scmp.eq.s32.totalorder %s24, 0
      %p45 = por %p43, %p44
      %p46 = scmp.ne.s32.totalorder %s32, %s33
      %p47 = scmp.eq.s32.totalorder %s25, 1
      %p48 = por %p46, %p47
      %p50 = scmp.ne.s32.totalorder %s33, %s49
      %p51 = scmp.eq.s32.totalorder %s25, 0
      %p52 = por %p50, %p51
      %s54 = sadd.s32 %s53, 1
      %p57 = scmp.eq.s32.totalorder %s19, 1
      %p58 = scmp.ne.s32.totalorder %s53, %s55
      %p59 = scmp.eq.s32.totalorder %s19, 0
      %p60 = por %p58, %p59
      %p61 = scmp.ne.s32.totalorder %s53, %s55
      %p62 = scmp.eq.s32.totalorder %s24, 1
      %p63 = por %p61, %p62
      %p64 = scmp.ne.s32.totalorder %s55, %s56
      %p65 = scmp.eq.s32.totalorder %s24, 0
      %p66 = por %p64, %p65
      %p67 = scmp.ne.s32.totalorder %s55, %s56
      %p68 = scmp.eq.s32.totalorder %s25, 1
      %p69 = por %p67, %p68
      %p71 = scmp.ne.s32.totalorder %s56, %s70
      %p72 = scmp.eq.s32.totalorder %s25, 0
      %p73 = por %p71, %p72
      %s75 = sadd.s32 %s74, 1
      %p78 = scmp.eq.s32.totalorder %s19, 1
      %p79 = scmp.ne.s32.totalorder %s74, %s76
      %p80 = scmp.eq.s32.totalorder %s19, 0
      %p81 = por %p79, %p80
      %p82 = scmp.ne.s32.totalorder %s74, %s76
      %p83 = scmp.eq.s32.totalorder %s24, 1
      %p84 = por %p82, %p83
      %p85 = scmp.ne.s32.totalorder %s76, %s77
      %p86 = scmp.eq.s32.totalorder %s24, 0
      %p87 = por %p85, %p86
      %p88 = scmp.ne.s32.totalorder %s76, %s77
      %p89 = scmp.eq.s32.totalorder %s25, 1
      %p90 = por %p88, %p89
      %p92 = scmp.ne.s32.totalorder %s77, %s91
      %p93 = scmp.eq.s32.totalorder %s25, 0
      %p94 = por %p92, %p93
      %s96 = sadd.s32 %s95, 1
      %p99 = scmp.eq.s32.totalorder %s19, 1
      %p100 = scmp.ne.s32.totalorder %s95, %s97
      %p101 = scmp.eq.s32.totalorder %s19, 0
      %p102 = por %p100, %p101
      %p103 = scmp.ne.s32.totalorder %s95, %s97
      %p104 = scmp.eq.s32.totalorder %s24, 1
      %p105 = por %p103, %p104
      %p106 = scmp.ne.s32.totalorder %s97, %s98
      %p107 = scmp.eq.s32.totalorder %s24, 0
      %p108 = por %p106, %p107
      %p109 = scmp.ne.s32.totalorder %s97, %s98
      %p110 = scmp.eq.s32.totalorder %s25, 1
      %p111 = por %p109, %p110
      %p113 = scmp.ne.s32.totalorder %s98, %s112
      %p114 = scmp.eq.s32.totalorder %s25, 0
      %p115 = por %p113, %p114
      %s117 = sadd.s32 %s116, 1
      %p120 = scmp.eq.s32.totalorder %s19, 1
      %p121 = scmp.ne.s32.totalorder %s116, %s118
      %p122 = scmp.eq.s32.totalorder %s19, 0
      %p123 = por %p121, %p122
      %p124 = scmp.ne.s32.totalorder %s116, %s118
      %p125 = scmp.eq.s32.totalorder %s24, 1
      %p126 = por %p124, %p125
      %p127 = scmp.ne.s32.totalorder %s118, %s119
      %p128 = scmp.eq.s32.totalorder %s24, 0
      %p129 = por %p127, %p128
      %p130 = scmp.ne.s32.totalorder %s118, %s119
      %p131 = scmp.eq.s32.totalorder %s25, 1
      %p132 = por %p130, %p131
      %p134 = scmp.ne.s32.totalorder %s119, %s133
      %p135 = scmp.eq.s32.totalorder %s25, 0
      %p136 = por %p134, %p135
      %s138 = sadd.s32 %s137, 1
      %p141 = scmp.eq.s32.totalorder %s19, 1
      %p142 = scmp.ne.s32.totalorder %s137, %s139
      %p143 = scmp.eq.s32.totalorder %s19, 0
      %p144 = por %p142, %p143
      %p145 = scmp.ne.s32.totalorder %s137, %s139
      %p146 = scmp.eq.s32.totalorder %s24, 1
      %p147 = por %p145, %p146
      %p148 = scmp.ne.s32.totalorder %s139, %s140
      %p149 = scmp.eq.s32.totalorder %s24, 0
      %p150 = por %p148, %p149
      %p151 = scmp.ne.s32.totalorder %s139, %s140
      %p152 = scmp.eq.s32.totalorder %s25, 1
      %p153 = por %p151, %p152
      %p155 = scmp.ne.s32.totalorder %s140, %s154
      %p156 = scmp.eq.s32.totalorder %s25, 0
      %p157 = por %p155, %p156
      %s159 = sadd.s32 %s158, 1
      %p162 = scmp.eq.s32.totalorder %s19, 1
      %p163 = scmp.ne.s32.totalorder %s158, %s160
      %p164 = scmp.eq.s32.totalorder %s19, 0
      %p165 = por %p163, %p164
      %p166 = scmp.ne.s32.totalorder %s158, %s160
      %p167 = scmp.eq.s32.totalorder %s24, 1
      %p168 = por %p166, %p167
      %p169 = scmp.ne.s32.totalorder %s160, %s161
      %p170 = scmp.eq.s32.totalorder %s24, 0
      %p171 = por %p169, %p170
      %p172 = scmp.ne.s32.totalorder %s160, %s161
      %p173 = scmp.eq.s32.totalorder %s25, 1
      %p174 = por %p172, %p173
      %p176 = scmp.ne.s32.totalorder %s161, %s175
      %p177 = scmp.eq.s32.totalorder %s25, 0
      %p178 = por %p176, %p177
      %s180 = sadd.s32 %s179, 1
      %p183 = scmp.eq.s32.totalorder %s19, 1
      %p184 = scmp.ne.s32.totalorder %s179, %s181
      %p185 = scmp.eq.s32.totalorder %s19, 0
      %p186 = por %p184, %p185
      %p187 = scmp.ne.s32.totalorder %s179, %s181
      %p188 = scmp.eq.s32.totalorder %s24, 1
      %p189 = por %p187, %p188
      %p190 = scmp.ne.s32.totalorder %s181, %s182
      %p191 = scmp.eq.s32.totalorder %s24, 0
      %p192 = por %p190, %p191
      %p193 = scmp.ne.s32.totalorder %s181, %s182
      %p194 = scmp.eq.s32.totalorder %s25, 1
      %p195 = por %p193, %p194
      %p197 = scmp.ne.s32.totalorder %s182, %s196
      %p198 = scmp.eq.s32.totalorder %s25, 0
      %p199 = por %p197, %p198
      %s201 = sadd.s32 %s200, 1
      %p204 = scmp.eq.s32.totalorder %s19, 1
      %p205 = scmp.ne.s32.totalorder %s200, %s202
      %p206 = scmp.eq.s32.totalorder %s19, 0
      %p207 = por %p205, %p206
      %p208 = scmp.ne.s32.totalorder %s200, %s202
      %p209 = scmp.eq.s32.totalorder %s24, 1
      %p210 = por %p208, %p209
      %p211 = scmp.ne.s32.totalorder %s202, %s203
      %p212 = scmp.eq.s32.totalorder %s24, 0
      %p213 = por %p211, %p212
      %p214 = scmp.ne.s32.totalorder %s202, %s203
      %p215 = scmp.eq.s32.totalorder %s25, 1
      %p216 = por %p214, %p215
      %p218 = scmp.ne.s32.totalorder %s203, %s217
      %p219 = scmp.eq.s32.totalorder %s25, 0
      %p220 = por %p218, %p219
      %s222 = sadd.s32 %s221, 1
      %p225 = scmp.eq.s32.totalorder %s19, 1
      %p226 = scmp.ne.s32.totalorder %s221, %s223
      %p227 = scmp.eq.s32.totalorder %s19, 0
      %p228 = por %p226, %p227
      %p229 = scmp.ne.s32.totalorder %s221, %s223
      %p230 = scmp.eq.s32.totalorder %s24, 1
      %p231 = por %p229, %p230
      %p232 = scmp.ne.s32.totalorder %s223, %s224
      %p233 = scmp.eq.s32.totalorder %s24, 0
      %p234 = por %p232, %p233
      %p235 = scmp.ne.s32.totalorder %s223, %s224
      %p236 = scmp.eq.s32.totalorder %s25, 1
      %p237 = por %p235, %p236
      %p239 = scmp.ne.s32.totalorder %s224, %s238
      %p240 = scmp.eq.s32.totalorder %s25, 0
      %p241 = por %p239, %p240
      %s243 = sadd.s32 %s242, 1
      %p246 = scmp.eq.s32.totalorder %s19, 1
      %p247 = scmp.ne.s32.totalorder %s242, %s244
      %p248 = scmp.eq.s32.totalorder %s19, 0
      %p249 = por %p247, %p248
      %p250 = scmp.ne.s32.totalorder %s242, %s244
      %p251 = scmp.eq.s32.totalorder %s24, 1
      %p252 = por %p250, %p251
      %p253 = scmp.ne.s32.totalorder %s244, %s245
      %p254 = scmp.eq.s32.totalorder %s24, 0
      %p255 = por %p253, %p254
      %p256 = scmp.ne.s32.totalorder %s244, %s245
      %p257 = scmp.eq.s32.totalorder %s25, 1
      %p258 = por %p256, %p257
      %p260 = scmp.ne.s32.totalorder %s245, %s259
      %p261 = scmp.eq.s32.totalorder %s25, 0
      %p262 = por %p260, %p261
      %s263 = ssub.s32 %s19, %s26
      %p264 = scmp.eq.s32.totalorder %s263, 0
      %s266 = sadd.s32 %s265, 1
      %s267 = scalar_select %p264, %s265, %s266
      %p270 = pneg %p264
      %p271 = scmp.eq.s32.totalorder %s19, 1
      %p272 = por %p270, %p271
      %p273 = scmp.ne.s32.totalorder %s265, %s268
      %p274 = scmp.eq.s32.totalorder %s19, 0
      %p275 = por %p273, %p274
      %p276 = scmp.ne.s32.totalorder %s265, %s268
      %p277 = scmp.eq.s32.totalorder %s24, 1
      %p278 = por %p276, %p277
      %p279 = scmp.ne.s32.totalorder %s268, %s269
      %p280 = scmp.eq.s32.totalorder %s24, 0
      %p281 = por %p279, %p280
      %p282 = scmp.ne.s32.totalorder %s268, %s269
      %p283 = scmp.eq.s32.totalorder %s25, 1
      %p284 = por %p282, %p283
      %p286 = scmp.ne.s32.totalorder %s269, %s285
      %p287 = scmp.eq.s32.totalorder %s25, 0
      %p288 = por %p286, %p287
      %p289 = scmp.le.s32.totalorder 1, %s19
      %p290 = scmp.lt.s32.totalorder %s19, 3
      %p291 = pnand %p289, %p290
      %p292 = pneg %p291
      // Predicated region
      $region9: #{mlp_forward.1} parent=5 // pred_check
        _
      $region10: #{mlp_forward.1} parent=5 // pred_check_branch
        %294 = sbr.rel (%p291) target = $region12
      $region11: #{mlp_forward.1} parent=5 // pred_region
        %s295 = ssub.s32 %s19, 1
        // Predicated region
        $region13: #{mlp_forward.1} parent=11 // pred_check
          %p296 = pneg %p66
        $region14: #{mlp_forward.1} parent=11 // pred_check_branch
          %298 = sbr.rel (%p296) target = $region16
        $region15: #{mlp_forward.1} parent=11 // pred_region
          _
        $region16: #{mlp_forward.1} parent=11 // pred_fallthru
          _
        // Predicated region
        $region17: #{mlp_forward.1} parent=11 // pred_check
          %p299 = pneg %p87
        $region18: #{mlp_forward.1} parent=11 // pred_check_branch
          %301 = sbr.rel (%p299) target = $region20
        $region19: #{mlp_forward.1} parent=11 // pred_region
          _
        $region20: #{mlp_forward.1} parent=11 // pred_fallthru
          _
        // Predicated region
        $region21: #{mlp_forward.1} parent=11 // pred_check
          %p302 = pneg %p108
        $region22: #{mlp_forward.1} parent=11 // pred_check_branch
          %304 = sbr.rel (%p302) target = $region24
        $region23: #{mlp_forward.1} parent=11 // pred_region
          _
        $region24: #{mlp_forward.1} parent=11 // pred_fallthru
          _
        // Predicated region
        $region25: #{mlp_forward.1} parent=11 // pred_check
          %p305 = pneg %p129
        $region26: #{mlp_forward.1} parent=11 // pred_check_branch
          %307 = sbr.rel (%p305) target = $region28
        $region27: #{mlp_forward.1} parent=11 // pred_region
          _
        $region28: #{mlp_forward.1} parent=11 // pred_fallthru
          _
        // Predicated region
        $region29: #{mlp_forward.1} parent=11 // pred_check
          %p308 = pneg %p150
        $region30: #{mlp_forward.1} parent=11 // pred_check_branch
          %310 = sbr.rel (%p308) target = $region32
        $region31: #{mlp_forward.1} parent=11 // pred_region
          _
        $region32: #{mlp_forward.1} parent=11 // pred_fallthru
          _
        // Predicated region
        $region33: #{mlp_forward.1} parent=11 // pred_check
          %p311 = pneg %p171
        $region34: #{mlp_forward.1} parent=11 // pred_check_branch
          %313 = sbr.rel (%p311) target = $region36
        $region35: #{mlp_forward.1} parent=11 // pred_region
          _
        $region36: #{mlp_forward.1} parent=11 // pred_fallthru
          _
        // Predicated region
        $region37: #{mlp_forward.1} parent=11 // pred_check
          %p314 = pneg %p192
        $region38: #{mlp_forward.1} parent=11 // pred_check_branch
          %316 = sbr.rel (%p314) target = $region40
        $region39: #{mlp_forward.1} parent=11 // pred_region
          _
        $region40: #{mlp_forward.1} parent=11 // pred_fallthru
          _
        // Predicated region
        $region41: #{mlp_forward.1} parent=11 // pred_check
          %p317 = pneg %p213
        $region42: #{mlp_forward.1} parent=11 // pred_check_branch
          %319 = sbr.rel (%p317) target = $region44
        $region43: #{mlp_forward.1} parent=11 // pred_region
          _
        $region44: #{mlp_forward.1} parent=11 // pred_fallthru
          _
        // Predicated region
        $region45: #{mlp_forward.1} parent=11 // pred_check
          %p320 = pneg %p234
        $region46: #{mlp_forward.1} parent=11 // pred_check_branch
          %322 = sbr.rel (%p320) target = $region48
        $region47: #{mlp_forward.1} parent=11 // pred_region
          _
        $region48: #{mlp_forward.1} parent=11 // pred_fallthru
          _
        // Predicated region
        $region49: #{mlp_forward.1} parent=11 // pred_check
          %p323 = pneg %p255
        $region50: #{mlp_forward.1} parent=11 // pred_check_branch
          %325 = sbr.rel (%p323) target = $region52
        $region51: #{mlp_forward.1} parent=11 // pred_region
          _
        $region52: #{mlp_forward.1} parent=11 // pred_fallthru
          _
      $region12: #{mlp_forward.1} parent=5 // pred_fallthru
        _
      %p326 = scmp.lt.s32.totalorder %s19, 2
      // Predicated region
      $region53: #{mlp_forward.1} parent=5 // pred_check
        %p327 = pneg %p326
      $region54: #{mlp_forward.1} parent=5 // pred_check_branch
        %329 = sbr.rel (%p327) target = $region56
      $region55: #{mlp_forward.1} parent=5 // pred_region
        // Predicated region
        $region57: #{mlp_forward.1} parent=55 // pred_check
          %p330 = pneg %p39
        $region58: #{mlp_forward.1} parent=55 // pred_check_branch
          %332 = sbr.rel (%p330) target = $region60
        $region59: #{mlp_forward.1} parent=55 // pred_region
          %s333 = smul.u32 2, %s19
          %s334 = ssub.s32 3, %s333
          %p335 = scmp.lt.s32.totalorder %s334, 2
          %s336 = scalar_select %p335, %s334, 2
          %s337 = smul.u32 128, %s336
          %p338 = scmp.lt.s32.totalorder %s333, 2
          %s339 = scalar_select %p338, %s333, 2
          %s340 = smul.addr %s339, 8
          %s341 = scalar_lea.vmem %s0, %s340
          %s342 = smul.u32 2, %s19
          %s343 = ssub.s32 3, %s342
          %p344 = scmp.lt.s32.totalorder %s343, 2
          %s345 = scalar_select %p344, %s343, 2
          %s346 = smul.u32 128, %s345
        $region60: #{mlp_forward.1} parent=55 // pred_fallthru
          _
      $region56: #{mlp_forward.1} parent=5 // pred_fallthru
        _
      %p347 = scmp.le.s32.totalorder 1, %s19
      %p348 = scmp.lt.s32.totalorder %s19, 3
      %p349 = pnand %p347, %p348
      %p350 = pneg %p349
      // Predicated region
      $region61: #{mlp_forward.1} parent=5 // pred_check
        _
      $region62: #{mlp_forward.1} parent=5 // pred_check_branch
        %352 = sbr.rel (%p349) target = $region64
      $region63: #{mlp_forward.1} parent=5 // pred_region
        %s353 = ssub.s32 %s19, 1
        %s354 = smul.u32 2, %s24
        %s355 = ssub.s32 3, %s354
        %p356 = scmp.lt.s32.totalorder %s355, 2
        %s357 = scalar_select %p356, %s355, 2
        %s358 = smul.u32 128, %s357
        %p359 = scmp.lt.s32.totalorder %s354, 2
        %s360 = scalar_select %p359, %s354, 2
        %s361 = smul.addr %s360, 8
        %s362 = scalar_lea.vmem %s0, %s361
        %p363 = pneg %p45
        %p364 = pneg %p42
        %p365 = pneg %p66
        %p366 = pneg %p63
        %p367 = pneg %p87
        %p368 = pneg %p84
        %p369 = pneg %p108
        %p370 = pneg %p105
        %p371 = pneg %p129
        %p372 = pneg %p126
        %p373 = pneg %p150
        %p374 = pneg %p147
        %p375 = pneg %p171
        %p376 = pneg %p168
        %p377 = pneg %p192
        %p378 = pneg %p189
        %p379 = pneg %p213
        %p380 = pneg %p210
        %p381 = pneg %p234
        %p382 = pneg %p231
        %p383 = pneg %p255
        %p384 = pneg %p252
        %p385 = pneg %p281
        %p386 = pneg %p278
        %s387 = sand.u32 %s268, 1
        %s388 = sand.u32 %s268, 1
        %s389 = smul.addr %s388, 16
        %s390 = scalar_lea.vmem [#allocation3], %s389
        %s391 = smul.u32 2, %s24
        %s392 = ssub.s32 3, %s391
        %p393 = scmp.lt.s32.totalorder %s392, 2
        %s394 = scalar_select %p393, %s392, 2
        %s395 = smul.u32 128, %s394
        %p396 = scmp.lt.s32.totalorder %s391, 2
        %s397 = scalar_select %p396, %s391, 2
        %s398 = smul.addr %s397, 8
        %s399 = scalar_lea.vmem %s0, %s398
        %s400 = smul.u32 2, %s24
        %s401 = ssub.s32 3, %s400
        %p402 = scmp.lt.s32.totalorder %s401, 2
        %s403 = scalar_select %p402, %s401, 2
        %s404 = smul.u32 128, %s403
        %s405 = smul.u32 2, %s24
        %s406 = ssub.s32 3, %s405
        %p407 = scmp.lt.s32.totalorder %s406, 2
        %s408 = scalar_select %p407, %s406, 2
        %s409 = smul.u32 128, %s408
        %v411 = vld [vmem:[%s399] sm:$0xff]
        %v412 = vld [vmem:[%s399 + $0x8] sm:$0xff]
        %v413 = vld [vmem:[%s1] sm:$0x1]
        %415 = vset.pattern.permute.xlu0 0
        %416 = vperm.xlu0 %415, %v411
        %v417 = vpop.permute.xlu0 %416
        %420 = vset.pattern.permute.xlu0 0
        %421 = vperm.xlu0 %420, %v412
        %v422 = vpop.permute.xlu0 %421
        %v425 = vlaneseq
        %v426 = vshrl.u32 %v425, 7
        %v427 = vsub.s32 0, %v426
        %v428 = vrot.slane %v413, %v427
        %v430 = vmul.f32 %v417, %v428
        %v431 = vmul.f32 %v422, %v428
        %v432 = vld [vmem:[%s2] sm:$0x1]
        %v434 = vlaneseq
        %v435 = vshrl.u32 %v434, 7
        %v436 = vsub.s32 0, %v435
        %v437 = vrot.slane %v432, %v436
        %v439 = vadd.f32 %v430, %v437
        %v440 = vadd.f32 %v431, %v437
        %v441 = vmax.f32 %v439, 0.0
        %v442 = vmax.f32 %v440, 0.0
        %v443 = vpack.c.bf16 %v442, %v441
        %v444 = vld [vmem:[%s3] sm:$0xf]
        %v445 = vld [vmem:[%s3 + $0x4] sm:$0xf]
        %v446 = vld [vmem:[%s3 + $0x8] sm:$0xf]
        %v447 = vld [vmem:[%s3 + $0xc] sm:$0xf]
        %v448 = vld [vmem:[%s3 + $0x10] sm:$0xf]
        %v449 = vld [vmem:[%s3 + $0x14] sm:$0xf]
        %v450 = vld [vmem:[%s3 + $0x18] sm:$0xf]
        %v451 = vld [vmem:[%s3 + $0x1c] sm:$0xf]
        %v452 = vld [vmem:[%s3 + $0x20] sm:$0xf]
        %v453 = vld [vmem:[%s3 + $0x24] sm:$0xf]
        %v454 = vld [vmem:[%s3 + $0x28] sm:$0xf]
        %v455 = vld [vmem:[%s3 + $0x2c] sm:$0xf]
        %v456 = vld [vmem:[%s3 + $0x30] sm:$0xf]
        %v457 = vld [vmem:[%s3 + $0x34] sm:$0xf]
        %v458 = vld [vmem:[%s3 + $0x38] sm:$0xf]
        %v459 = vld [vmem:[%s3 + $0x3c] sm:$0xf]
        %v460 = vld [vmem:[%s4] sm:$0x1]
        %v462 = vlaneseq
        %v463 = vshrl.u32 %v462, 7
        %v464 = vsub.s32 0, %v463
        %v465 = vrot.slane %v460, %v464
        %v483 = vunpack.c.l.b16 %v444
        %v484 = vunpack.c.l.b16 %v445
        %v485 = vunpack.c.l.b16 %v446
        %v486 = vunpack.c.l.b16 %v447
        %v487 = vunpack.c.l.b16 %v448
        %v488 = vunpack.c.l.b16 %v449
        %v489 = vunpack.c.l.b16 %v450
        %v490 = vunpack.c.l.b16 %v451
        %v491 = vunpack.c.l.b16 %v452
        %v492 = vunpack.c.l.b16 %v453
        %v493 = vunpack.c.l.b16 %v454
        %v494 = vunpack.c.l.b16 %v455
        %v495 = vunpack.c.l.b16 %v456
        %v496 = vunpack.c.l.b16 %v457
        %v497 = vunpack.c.l.b16 %v458
        %v498 = vunpack.c.l.b16 %v459
        %v499 = vpack.c.b16 %v484, %v483
        %v500 = vpack.c.b16 %v486, %v485
        %v501 = vpack.c.b16 %v488, %v487
        %v502 = vpack.c.b16 %v490, %v489
        %v503 = vpack.c.b16 %v492, %v491
        %v504 = vpack.c.b16 %v494, %v493
        %v505 = vpack.c.b16 %v496, %v495
        %v506 = vpack.c.b16 %v498, %v497
        %515 = vmatprep.subr.bf16.mxu0 0
        %516 = vmatpush1.bf16.msra.mxu0 %v506
        %517 = vmatprep.subr.bf16.mxu0 0
        %518 = vmatpush1.bf16.msra.mxu0 %v505
        %519 = vmatprep.subr.bf16.mxu0 0
        %520 = vmatpush1.bf16.msra.mxu0 %v504
        %521 = vmatprep.subr.bf16.mxu0 0
        %522 = vmatpush1.bf16.msra.mxu0 %v503
        %523 = vmatprep.subr.bf16.mxu0 0
        %524 = vmatpush1.bf16.msra.mxu0 %v502
        %525 = vmatprep.subr.bf16.mxu0 0
        %526 = vmatpush1.bf16.msra.mxu0 %v501
        %527 = vmatprep.subr.bf16.mxu0 0
        %528 = vmatpush1.bf16.msra.mxu0 %v500
        %529 = vmatprep.subr.bf16.mxu0 0
        %530 = vmatpush1.bf16.msra.mxu0 %v499
        %531 = vmatprep.subr.bf16.mxu0 0
        %532 = vmatpush2.bf16.msra.mxu0 0
        %533 = vmatprep.subr.bf16.mxu0 0
        %534 = vmatpush2.bf16.msra.mxu0 0
        %535 = vmatprep.subr.bf16.mxu0 0
        %536 = vmatpush2.bf16.msra.mxu0 0
        %537 = vmatprep.subr.bf16.mxu0 0
        %538 = vmatpush2.bf16.msra.mxu0 0
        %539 = vmatprep.subr.bf16.mxu0 0
        %540 = vmatpush2.bf16.msra.mxu0 0
        %541 = vmatprep.subr.bf16.mxu0 0
        %542 = vmatpush2.bf16.msra.mxu0 0
        %543 = vmatprep.subr.bf16.mxu0 0
        %544 = vmatpush2.bf16.msra.mxu0 0
        %545 = vmatprep.subr.bf16.mxu0 0
        %546 = vmatpush2.bf16.msra.mxu0 0
        %547 = vmatprep.mubr.bf16.mxu0 0
        %548 = vmatmul.mubr.bf16.gmra.mxu0 %v443
        %v549 = vpop.f32.mrf.mxu0
        %v550 = vadd.f32 %v465, %v549
        %v551 = vpop.f32.mrf.mxu0
        %v552 = vpop.f32.mrf.mxu0
        %v553 = vadd.f32 %v465, %v552
        %v554 = vpop.f32.mrf.mxu0
        %555 = vdwg.mxu0
        %v556 = vmax.f32 %v550, 0.0
        %v557 = vmax.f32 %v553, 0.0
        %v558 = vpack.c.bf16 %v557, %v556
        %v559 = vld [vmem:[%s5] sm:$0xf]
        %v560 = vld [vmem:[%s5 + $0x4] sm:$0xf]
        %v561 = vld [vmem:[%s5 + $0x8] sm:$0xf]
        %v562 = vld [vmem:[%s5 + $0xc] sm:$0xf]
        %v563 = vld [vmem:[%s5 + $0x10] sm:$0xf]
        %v564 = vld [vmem:[%s5 + $0x14] sm:$0xf]
        %v565 = vld [vmem:[%s5 + $0x18] sm:$0xf]
        %v566 = vld [vmem:[%s5 + $0x1c] sm:$0xf]
        %v567 = vld [vmem:[%s5 + $0x20] sm:$0xf]
        %v568 = vld [vmem:[%s5 + $0x24] sm:$0xf]
        %v569 = vld [vmem:[%s5 + $0x28] sm:$0xf]
        %v570 = vld [vmem:[%s5 + $0x2c] sm:$0xf]
        %v571 = vld [vmem:[%s5 + $0x30] sm:$0xf]
        %v572 = vld [vmem:[%s5 + $0x34] sm:$0xf]
        %v573 = vld [vmem:[%s5 + $0x38] sm:$0xf]
        %v574 = vld [vmem:[%s5 + $0x3c] sm:$0xf]
        %v575 = vld [vmem:[%s6] sm:$0x1]
        %v577 = vlaneseq
        %v578 = vshrl.u32 %v577, 7
        %v579 = vsub.s32 0, %v578
        %v580 = vrot.slane %v575, %v579
        %v598 = vunpack.c.l.b16 %v559
        %v599 = vunpack.c.l.b16 %v560
        %v600 = vunpack.c.l.b16 %v561
        %v601 = vunpack.c.l.b16 %v562
        %v602 = vunpack.c.l.b16 %v563
        %v603 = vunpack.c.l.b16 %v564
        %v604 = vunpack.c.l.b16 %v565
        %v605 = vunpack.c.l.b16 %v566
        %v606 = vunpack.c.l.b16 %v567
        %v607 = vunpack.c.l.b16 %v568
        %v608 = vunpack.c.l.b16 %v569
        %v609 = vunpack.c.l.b16 %v570
        %v610 = vunpack.c.l.b16 %v571
        %v611 = vunpack.c.l.b16 %v572
        %v612 = vunpack.c.l.b16 %v573
        %v613 = vunpack.c.l.b16 %v574
        %v614 = vpack.c.b16 %v599, %v598
        %v615 = vpack.c.b16 %v601, %v600
        %v616 = vpack.c.b16 %v603, %v602
        %v617 = vpack.c.b16 %v605, %v604
        %v618 = vpack.c.b16 %v607, %v606
        %v619 = vpack.c.b16 %v609, %v608
        %v620 = vpack.c.b16 %v611, %v610
        %v621 = vpack.c.b16 %v613, %v612
        %630 = vmatprep.subr.bf16.mxu0 0
        %631 = vmatpush1.bf16.msra.mxu0 %v621
        %632 = vmatprep.subr.bf16.mxu0 0
        %633 = vmatpush1.bf16.msra.mxu0 %v620
        %634 = vmatprep.subr.bf16.mxu0 0
        %635 = vmatpush1.bf16.msra.mxu0 %v619
        %636 = vmatprep.subr.bf16.mxu0 0
        %637 = vmatpush1.bf16.msra.mxu0 %v618
        %638 = vmatprep.subr.bf16.mxu0 0
        %639 = vmatpush1.bf16.msra.mxu0 %v617
        %640 = vmatprep.subr.bf16.mxu0 0
        %641 = vmatpush1.bf16.msra.mxu0 %v616
        %642 = vmatprep.subr.bf16.mxu0 0
        %643 = vmatpush1.bf16.msra.mxu0 %v615
        %644 = vmatprep.subr.bf16.mxu0 0
        %645 = vmatpush1.bf16.msra.mxu0 %v614
        %646 = vmatprep.subr.bf16.mxu0 0
        %647 = vmatpush2.bf16.msra.mxu0 0
        %648 = vmatprep.subr.bf16.mxu0 0
        %649 = vmatpush2.bf16.msra.mxu0 0
        %650 = vmatprep.subr.bf16.mxu0 0
        %651 = vmatpush2.bf16.msra.mxu0 0
        %652 = vmatprep.subr.bf16.mxu0 0
        %653 = vmatpush2.bf16.msra.mxu0 0
        %654 = vmatprep.subr.bf16.mxu0 0
        %655 = vmatpush2.bf16.msra.mxu0 0
        %656 = vmatprep.subr.bf16.mxu0 0
        %657 = vmatpush2.bf16.msra.mxu0 0
        %658 = vmatprep.subr.bf16.mxu0 0
        %659 = vmatpush2.bf16.msra.mxu0 0
        %660 = vmatprep.subr.bf16.mxu0 0
        %661 = vmatpush2.bf16.msra.mxu0 0
        %662 = vmatprep.mubr.bf16.mxu0 0
        %663 = vmatmul.mubr.bf16.gmra.mxu0 %v558
        %v664 = vpop.f32.mrf.mxu0
        %v665 = vadd.f32 %v580, %v664
        %v666 = vpop.f32.mrf.mxu0
        %v667 = vpop.f32.mrf.mxu0
        %v668 = vadd.f32 %v580, %v667
        %v669 = vpop.f32.mrf.mxu0
        %670 = vdwg.mxu0
        %v671 = vmax.f32 %v665, 0.0
        %v672 = vmax.f32 %v668, 0.0
        %v673 = vpack.c.bf16 %v672, %v671
        %v674 = vld [vmem:[%s7] sm:$0xf]
        %v675 = vld [vmem:[%s7 + $0x4] sm:$0xf]
        %v676 = vld [vmem:[%s7 + $0x8] sm:$0xf]
        %v677 = vld [vmem:[%s7 + $0xc] sm:$0xf]
        %v678 = vld [vmem:[%s7 + $0x10] sm:$0xf]
        %v679 = vld [vmem:[%s7 + $0x14] sm:$0xf]
        %v680 = vld [vmem:[%s7 + $0x18] sm:$0xf]
        %v681 = vld [vmem:[%s7 + $0x1c] sm:$0xf]
        %v682 = vld [vmem:[%s8] sm:$0x1]
        %v684 = vlaneseq
        %v685 = vshrl.u32 %v684, 7
        %v686 = vsub.s32 0, %v685
        %v687 = vrot.slane %v682, %v686
        %v697 = vunpack.c.l.b16 %v674
        %v698 = vunpack.c.l.b16 %v675
        %v699 = vunpack.c.l.b16 %v676
        %v700 = vunpack.c.l.b16 %v677
        %v701 = vunpack.c.l.b16 %v678
        %v702 = vunpack.c.l.b16 %v679
        %v703 = vunpack.c.l.b16 %v680
        %v704 = vunpack.c.l.b16 %v681
        %v705 = vpack.c.b16 %v698, %v697
        %v706 = vpack.c.b16 %v700, %v699
        %v707 = vpack.c.b16 %v702, %v701
        %v708 = vpack.c.b16 %v704, %v703
        %vm713 = vcmask 523264
        %v715 = vsel %vm713, %v673, 0
        %717 = vmatprep.subr.bf16.mxu0 0
        %718 = vmatpush1.bf16.msra.mxu0 0
        %719 = vmatprep.subr.bf16.mxu0 0
        %720 = vmatpush1.bf16.msra.mxu0 0
        %721 = vmatprep.subr.bf16.mxu0 0
        %722 = vmatpush1.bf16.msra.mxu0 0
        %723 = vmatprep.subr.bf16.mxu0 0
        %724 = vmatpush1.bf16.msra.mxu0 0
        %725 = vmatprep.subr.bf16.mxu0 0
        %726 = vmatpush1.bf16.msra.mxu0 %v708
        %727 = vmatprep.subr.bf16.mxu0 0
        %728 = vmatpush1.bf16.msra.mxu0 %v707
        %729 = vmatprep.subr.bf16.mxu0 0
        %730 = vmatpush1.bf16.msra.mxu0 %v706
        %731 = vmatprep.subr.bf16.mxu0 0
        %732 = vmatpush1.bf16.msra.mxu0 %v705
        %733 = vmatprep.subr.bf16.mxu0 0
        %734 = vmatpush2.bf16.msra.mxu0 0
        %735 = vmatprep.subr.bf16.mxu0 0
        %736 = vmatpush2.bf16.msra.mxu0 0
        %737 = vmatprep.subr.bf16.mxu0 0
        %738 = vmatpush2.bf16.msra.mxu0 0
        %739 = vmatprep.subr.bf16.mxu0 0
        %740 = vmatpush2.bf16.msra.mxu0 0
        %741 = vmatprep.subr.bf16.mxu0 0
        %742 = vmatpush2.bf16.msra.mxu0 0
        %743 = vmatprep.subr.bf16.mxu0 0
        %744 = vmatpush2.bf16.msra.mxu0 0
        %745 = vmatprep.subr.bf16.mxu0 0
        %746 = vmatpush2.bf16.msra.mxu0 0
        %747 = vmatprep.subr.bf16.mxu0 0
        %748 = vmatpush2.bf16.msra.mxu0 0
        %749 = vmatprep.mubr.bf16.mxu0 0
        %750 = vmatmul.mubr.bf16.gmra.mxu0 %v715
        %v751 = vpop.f32.mrf.mxu0
        %v752 = vadd.f32 %v687, %v751
        %v753 = vpop.f32.mrf.mxu0
        %v754 = vpop.f32.mrf.mxu0
        %v755 = vadd.f32 %v687, %v754
        %v756 = vpop.f32.mrf.mxu0
        %757 = vdwg.mxu0
        %v758 = vmax.f32 %v752, 0.0
        %v759 = vmax.f32 %v755, 0.0
        %v760 = vld [vmem:[%s9] sm:$0x1]
        %v762 = vlaneseq
        %v763 = vshrl.u32 %v762, 7
        %v764 = vsub.s32 0, %v763
        %v765 = vrot.slane %v760, %v764
        %v767 = vmul.f32 %v758, %v765
        %v768 = vmul.f32 %v759, %v765
        %v769 = vsel %vm713, %v767, 0.0
        %770 = vadd.xlane.f32.xlu0 %v769
        %v771 = vpop.xlane.xlu0 %770
        %v772 = vsel %vm713, %v768, 0.0
        %773 = vadd.xlane.f32.xlu0 %v772
        %v774 = vpop.xlane.xlu0 %773
        %v775 = vld [vmem:[#allocation2] sm:$0x1]
        %v777 = vlaneseq
        %v778 = vshrl.u32 %v777, 7
        %v779 = vsub.s32 0, %v778
        %v780 = vrot.slane %v775, %v779
        %v782 = vadd.f32 %v771, %v780
        %v783 = vadd.f32 %v774, %v780
        %vm784 = vcmask 7168
        %785 = vst.msk [vmem:[%s390] sm:$0xff] %vm784, %v782
        %786 = vst.msk [vmem:[%s390 + $0x8] sm:$0xff] %vm784, %v783
        %s787 = sand.u32 %s268, 1
        %s788 = sand.u32 %s268, 1
        %s789 = smul.addr %s788, 16
        %s790 = scalar_lea.vmem [#allocation3], %s789
        // Predicated region
        $region65: #{mlp_forward.1} parent=63 // pred_check
          %p791 = pneg %p278
        $region66: #{mlp_forward.1} parent=63 // pred_check_branch
          %793 = sbr.rel (%p791) target = $region68
        $region67: #{mlp_forward.1} parent=63 // pred_region
          %s794 = smul.u32 2, %s24
          %s795 = ssub.s32 3, %s794
          %p796 = scmp.lt.s32.totalorder %s795, 2
          %s797 = scalar_select %p796, %s795, 2
          %s798 = smul.u32 128, %s797
          %p799 = scmp.ne.s32.totalorder 0, %s798
          %s800 = smul.addr %s794, 8
          %s801 = scalar_lea.vmem %s11, %s800
          // Predicated region
          $region69: #{mlp_forward.1} parent=67 // pred_check
            %p802 = pneg %p799
          $region70: #{mlp_forward.1} parent=67 // pred_check_branch
            %804 = sbr.rel (%p802) target = $region72
          $region71: #{mlp_forward.1} parent=67 // pred_region
            // Predicated region
            $region73: #{mlp_forward.1} parent=71 // pred_check
              _
            $region74: #{mlp_forward.1} parent=71 // pred_check_branch
              %806 = sbr.rel (0) target = $region76
            $region75: #{mlp_forward.1} parent=71 // pred_region
              // Predicated region
              $region95: #{mlp_forward.1} parent=75 // pred_check
                _
              $region96: #{mlp_forward.1} parent=75 // pred_check_branch
                %858 = sbr.rel (0) target = $region98
              $region97: #{mlp_forward.1} parent=75 // pred_region
                %s859 = sshrl.u32 %s797, 1
                // While loop
                $region99: #{mlp_forward.1} parent=97 // loop_pre_header
                  _
                $region100: #{mlp_forward.1} parent=97 // loop_header
                  %s861 = sphi 0, %s863
                  %p862 = scmp.ge.s32.totalorder %s861, %s859
                  %s866 = sphi 0, %s875
                  %s867 = sphi %s790, %s878
                  %s868 = sphi %s801, %s879
                $region101: #{mlp_forward.1} parent=97 // loop_header_branch
                  %865 = sbr.rel (%p862) target = $region105
                $region102: #{mlp_forward.1} parent=97 // loop_body
                  %v869 = vld [vmem:[%s867] sm:$0xff]
                  %870 = vst [vmem:[%s868] sm:$0xff] %v869
                  %v871 = vld [vmem:[%s867 + $0x8] sm:$0xff]
                  %872 = vst [vmem:[%s868 + $0x8] sm:$0xff] %v871
                  %s873 = sadd.s32 1, %s866
                  %p874 = scmp.ge.s32.totalorder %s873, %s859
                  %s875 = scalar_select %p874, 0, %s873
                  %s876 = smul.u32 %s875, 16
                  %s877 = smul.u32 %s875, 16
                  %s878 = scalar_lea.vmem %s790, %s876 [#allocation3]
                  %s879 = scalar_lea.vmem %s801, %s877
                $region103: #{mlp_forward.1} parent=97 // loop_footer
                  %s863 = sadd.s32 %s861, 1
                $region104: #{mlp_forward.1} parent=97 // loop_footer_branch
                  %860 = sbr.rel target = $region100
                $region105: #{mlp_forward.1} parent=97 // loop_exit
                  _
                %s880 = sshrl.u32 %s797, 1
                %s881 = sand.u32 %s797, 1
                %s882 = smul.u32 %s880, 2
                %s883 = smul.u32 8, %s882
                %s884 = scalar_lea.vmem %s790, %s883 [#allocation3]
                %s885 = smul.u32 8, %s882
                %s886 = scalar_lea.vmem %s801, %s885
                // While loop
                $region106: #{mlp_forward.1} parent=97 // loop_pre_header
                  _
                $region107: #{mlp_forward.1} parent=97 // loop_header
                  %s888 = sphi 0, %s890
                  %p889 = scmp.ge.s32.totalorder %s888, %s881
                  %s893 = sphi 0, %s900
                  %s894 = sphi %s884, %s903
                  %s895 = sphi %s886, %s904
                $region108: #{mlp_forward.1} parent=97 // loop_header_branch
                  %892 = sbr.rel (%p889) target = $region112
                $region109: #{mlp_forward.1} parent=97 // loop_body
                  %v896 = vld [vmem:[%s894] sm:$0xff]
                  %897 = vst [vmem:[%s895] sm:$0xff] %v896
                  %s898 = sadd.s32 1, %s893
                  %p899 = scmp.ge.s32.totalorder %s898, %s881
                  %s900 = scalar_select %p899, 0, %s898
                  %s901 = smul.u32 %s900, 8
                  %s902 = smul.u32 %s900, 8
                  %s903 = scalar_lea.vmem %s884, %s901 [#allocation3]
                  %s904 = scalar_lea.vmem %s886, %s902
                $region110: #{mlp_forward.1} parent=97 // loop_footer
                  %s890 = sadd.s32 %s888, 1
                $region111: #{mlp_forward.1} parent=97 // loop_footer_branch
                  %887 = sbr.rel target = $region107
                $region112: #{mlp_forward.1} parent=97 // loop_exit
                  _
              $region98: #{mlp_forward.1} parent=75 // pred_fallthru
                _
              // Predicated region
              $region113: #{mlp_forward.1} parent=75 // pred_check
                _
              $region114: #{mlp_forward.1} parent=75 // pred_check_branch
                %906 = sbr.rel target = $region116
              $region115: #{mlp_forward.1} parent=75 // pred_region
                _
              $region116: #{mlp_forward.1} parent=75 // pred_fallthru
                _
            $region76: #{mlp_forward.1} parent=71 // pred_fallthru
              _
            // Predicated region
            $region77: #{mlp_forward.1} parent=71 // pred_check
              _
            $region78: #{mlp_forward.1} parent=71 // pred_check_branch
              %808 = sbr.rel target = $region80
            $region79: #{mlp_forward.1} parent=71 // pred_region
              %s810 = ssub.s32 256, 1
              %s811 = sshrl.u32 %s797, 1
              // While loop
              $region81: #{mlp_forward.1} parent=79 // loop_pre_header
                _
              $region82: #{mlp_forward.1} parent=79 // loop_header
                %s813 = sphi 0, %s815
                %p814 = scmp.ge.s32.totalorder %s813, %s811
                %s818 = sphi 0, %s827
                %s819 = sphi %s790, %s830
                %s820 = sphi %s801, %s831
              $region83: #{mlp_forward.1} parent=79 // loop_header_branch
                %817 = sbr.rel (%p814) target = $region87
              $region84: #{mlp_forward.1} parent=79 // loop_body
                %v821 = vld [vmem:[%s819] sm:%s810]
                %822 = vst [vmem:[%s820] sm:%s810] %v821
                %v823 = vld [vmem:[%s819 + $0x8] sm:%s810]
                %824 = vst [vmem:[%s820 + $0x8] sm:%s810] %v823
                %s825 = sadd.s32 1, %s818
                %p826 = scmp.ge.s32.totalorder %s825, %s811
                %s827 = scalar_select %p826, 0, %s825
                %s828 = smul.u32 %s827, 16
                %s829 = smul.u32 %s827, 16
                %s830 = scalar_lea.vmem %s790, %s828 [#allocation3]
                %s831 = scalar_lea.vmem %s801, %s829
              $region85: #{mlp_forward.1} parent=79 // loop_footer
                %s815 = sadd.s32 %s813, 1
              $region86: #{mlp_forward.1} parent=79 // loop_footer_branch
                %812 = sbr.rel target = $region82
              $region87: #{mlp_forward.1} parent=79 // loop_exit
                _
              %s832 = sshrl.u32 %s797, 1
              %s833 = sand.u32 %s797, 1
              %s834 = smul.u32 %s832, 2
              %s835 = smul.u32 8, %s834
              %s836 = scalar_lea.vmem %s790, %s835 [#allocation3]
              %s837 = smul.u32 8, %s834
              %s838 = scalar_lea.vmem %s801, %s837
              // While loop
              $region88: #{mlp_forward.1} parent=79 // loop_pre_header
                _
              $region89: #{mlp_forward.1} parent=79 // loop_header
                %s840 = sphi 0, %s842
                %p841 = scmp.ge.s32.totalorder %s840, %s833
                %s845 = sphi 0, %s852
                %s846 = sphi %s836, %s855
                %s847 = sphi %s838, %s856
              $region90: #{mlp_forward.1} parent=79 // loop_header_branch
                %844 = sbr.rel (%p841) target = $region94
              $region91: #{mlp_forward.1} parent=79 // loop_body
                %v848 = vld [vmem:[%s846] sm:%s810]
                %849 = vst [vmem:[%s847] sm:%s810] %v848
                %s850 = sadd.s32 1, %s845
                %p851 = scmp.ge.s32.totalorder %s850, %s833
                %s852 = scalar_select %p851, 0, %s850
                %s853 = smul.u32 %s852, 8
                %s854 = smul.u32 %s852, 8
                %s855 = scalar_lea.vmem %s836, %s853 [#allocation3]
                %s856 = scalar_lea.vmem %s838, %s854
              $region92: #{mlp_forward.1} parent=79 // loop_footer
                %s842 = sadd.s32 %s840, 1
              $region93: #{mlp_forward.1} parent=79 // loop_footer_branch
                %839 = sbr.rel target = $region89
              $region94: #{mlp_forward.1} parent=79 // loop_exit
                _
            $region80: #{mlp_forward.1} parent=71 // pred_fallthru
              _
          $region72: #{mlp_forward.1} parent=67 // pred_fallthru
            _
          %907 = vnop
        $region68: #{mlp_forward.1} parent=63 // pred_fallthru
          _
      $region64: #{mlp_forward.1} parent=5 // pred_fallthru
        _
      %p908 = scmp.le.s32.totalorder 2, %s19
      // Predicated region
      $region117: #{mlp_forward.1} parent=5 // pred_check
        %p909 = pneg %p908
      $region118: #{mlp_forward.1} parent=5 // pred_check_branch
        %911 = sbr.rel (%p909) target = $region120
      $region119: #{mlp_forward.1} parent=5 // pred_region
        %s912 = ssub.s32 %s19, 2
        // Predicated region
        $region121: #{mlp_forward.1} parent=119 // pred_check
          %p913 = pneg %p284
        $region122: #{mlp_forward.1} parent=119 // pred_check_branch
          %915 = sbr.rel (%p913) target = $region124
        $region123: #{mlp_forward.1} parent=119 // pred_region
          %s916 = sand.u32 %s269, 1
          %s917 = sand.u32 %s269, 1
          %s918 = smul.addr %s917, 16
          %s919 = scalar_lea.vmem [#allocation3], %s918
        $region124: #{mlp_forward.1} parent=119 // pred_fallthru
          _
      $region120: #{mlp_forward.1} parent=5 // pred_fallthru
        _
    $region6: #{mlp_forward.1} parent=1 // loop_footer
      %s23 = sadd.s32 1, %s19
    $region7: #{mlp_forward.1} parent=1 // loop_footer_branch
      %18 = sbr.rel target = $region3
    $region8: #{mlp_forward.1} parent=1 // loop_exit
      _

</llo_original>
